<compile_context>
chip_gen: v5e
topology: v5e:2x2
jax: 0.10.0
libtpu: 0.0.40
codegen_flags: <defaults>
</compile_context>

<pallas_src>
import jax
import jax.numpy as jnp
from jax.experimental import pallas as pl
from jax.experimental.pallas import tpu as pltpu


def _theta_pl_kernel(t_ref, s1_ref, s2_ref, logk_ref, out_ref):
    # Blocks are (S, TB): support on the sublane axis, batch on the lane axis.
    t = t_ref[...].astype(jnp.float32)
    s1 = s1_ref[...].astype(jnp.float32)
    s2 = s2_ref[...].astype(jnp.float32)
    logk = logk_ref[...]                                   # (S, 1) -> lanes

    w = jnp.log(t) - logk                                  # log t - log K
    fused = s1 * jnp.log(s1) - s2 * jnp.log(s2) + (s1 - s2) * w
    theta_diff = jnp.sum(fused, axis=0, keepdims=True)     # (1, TB)
    out_ref[...] = jax.nn.sigmoid(10.0 * theta_diff)


def _pick_batch_tile(batch, support_size, bytes_per_elem=4):
    """Batch tile: a multiple of 128 lanes, bounded by a conservative VMEM
    budget (3 double-buffered f32 inputs <= ~24 MiB) so it is safe under the
    default scoped-VMEM limits of v5e / v6e / v7x."""
    vmem_budget = 24 * 1024 * 1024
    max_tb = vmem_budget // (3 * 2 * support_size * bytes_per_elem)
    max_tb = max(128, (max_tb // 128) * 128)
    target = 512                                   # ~85% of HBM roofline
    b_pad128 = ((batch + 127) // 128) * 128        # no need to exceed batch
    return min(target, max_tb, max(128, b_pad128))


def theta_pl_forward(t, s1, s2, k_param, uniform):
    """Pallas implementation of ThetaPL.forward.

    t, s1, s2: (B, S) float  (probability vectors over the support axis)
    k_param:   (S,)   float  (the learnable logits self.k)
    uniform:   (S,)   float  (the fixed uniform vector from __init__)
    returns:   (B,)   float32 = sigmoid(10 * (theta_x1 - theta_x2))
    """
    B, S = t.shape
    epsilon = 1e-05

    # Tiny O(S) parameter glue in plain JAX, hoisted out of the hot loop.
    K = jax.nn.softmax(k_param.astype(jnp.float32), axis=0) \
        + epsilon * uniform.astype(jnp.float32)
    logK = jnp.log(K).reshape(S, 1)                # (S, 1) column for the kernel

    tb = _pick_batch_tile(B, S)
    b_pad = ((B + tb - 1) // tb) * tb

    def _prep(x):
        # Lane-dense layout: (B, S) -> (S, B), batch on the 128-lane axis.
        xt = jnp.transpose(x)
        if b_pad > B:
            # Pad with 1.0 so log(1) = 0 keeps the padded lanes finite.
            xt = jnp.pad(xt, ((0, 0), (0, b_pad - B)), constant_values=1.0)
        return xt

    out = pl.pallas_call(
        _theta_pl_kernel,
        out_shape=jax.ShapeDtypeStruct((1, b_pad), jnp.float32),
        grid=(b_pad // tb,),
        in_specs=[
            pl.BlockSpec((S, tb), lambda i: (0, i)),
            pl.BlockSpec((S, tb), lambda i: (0, i)),
            pl.BlockSpec((S, tb), lambda i: (0, i)),
            pl.BlockSpec((S, 1), lambda i: (0, 0)),   # logK reused every block
        ],
        out_specs=pl.BlockSpec((1, tb), lambda i: (0, i)),
        compiler_params=pltpu.CompilerParams(
            dimension_semantics=("parallel",)),
    )(_prep(t), _prep(s1), _prep(s2), logK)

    return out[0, :B]


def theta_pl_reference(t, s1, s2, k_param, uniform):
    """Pure-JAX reference (mirrors the PyTorch code line-by-line)."""
    epsilon = 1e-05
    K = jax.nn.softmax(k_param, axis=0) + epsilon * uniform
    red1 = jnp.sum(s1 * jnp.log(s1), axis=1)
    rel1 = -jnp.sum(s1 * jnp.log(s1 / t), axis=1)
    inf1 = jnp.sum(s1 * jnp.log(s1 / K), axis=1)
    theta_x1 = red1 + rel1 + inf1
    red2 = jnp.sum(s2 * jnp.log(s2), axis=1)
    rel2 = -jnp.sum(s2 * jnp.log(s2 / t), axis=1)
    inf2 = jnp.sum(s2 * jnp.log(s2 / K), axis=1)
    theta_x2 = red2 + rel2 + inf2
    return jax.nn.sigmoid(10.0 * (theta_x1 - theta_x2))


if __name__ == "__main__":
    batch = 8
    support_size = 32

    # Deterministic parameter init (matches ThetaPL.__init__ with initial_k=None).
    uniform = jnp.full((support_size,), 1.0 / support_size, dtype=jnp.float32)
    k_param = uniform  # self.k = tensor(self.uniform)
    # alpha / beta exist in __init__ but are unused in forward.

    # Deterministic positive inputs (distributions over the support axis,
    # so all the logs are well-defined).
    key = jax.random.PRNGKey(0)
    kt, k1, k2 = jax.random.split(key, 3)
    t = jax.nn.softmax(jax.random.normal(kt, (batch, support_size)), axis=1)
    s1 = jax.nn.softmax(jax.random.normal(k1, (batch, support_size)), axis=1)
    s2 = jax.nn.softmax(jax.random.normal(k2, (batch, support_size)), axis=1)

    out = theta_pl_forward(t, s1, s2, k_param, uniform)
    jax.block_until_ready(out)

    ref = theta_pl_reference(t, s1, s2, k_param, uniform)
    assert out.shape == (batch,)
    # Fused log(a/b) -> log a - log b changes rounding slightly; keep a small
    # but meaningful tolerance for the sigmoid-compressed output.
    assert jnp.allclose(out, ref, atol=1e-4, rtol=1e-4), (out, ref)

    print("KERNEL_OK")
</pallas_src>

<mosaic_0001>
module attributes {stable_mosaic.version = 11 : i64} {
  func.func @_theta_pl_kernel(%arg0: i32, %arg1: memref<32x128xf32, #tpu.memory_space<vmem>>, %arg2: memref<32x128xf32, #tpu.memory_space<vmem>>, %arg3: memref<32x128xf32, #tpu.memory_space<vmem>>, %arg4: memref<32x1xf32, #tpu.memory_space<vmem>>, %arg5: memref<1x128xf32, #tpu.memory_space<vmem>>) attributes {dimension_semantics = [#tpu.dimension_semantics<parallel>], iteration_bounds = array<i64: 1>, scalar_prefetch = 0 : i64, scratch_operands = 0 : i64, tpu.core_type = #tpu.core_type<tc>, window_params = [{transform_indices = @transform_0, window_bounds = array<i64: 32, 128>}, {transform_indices = @transform_1, window_bounds = array<i64: 32, 128>}, {transform_indices = @transform_2, window_bounds = array<i64: 32, 128>}, {pipeline_mode = #tpu.pipeline_mode<synchronous>, transform_indices = @transform_3, window_bounds = array<i64: 32, 1>}, {transform_indices = @transform_4, window_bounds = array<i64: 1, 128>}]} {
    %c0 = arith.constant 0 : index
    %c0_0 = arith.constant 0 : index
    %0 = vector.load %arg1[%c0, %c0_0] : memref<32x128xf32, #tpu.memory_space<vmem>>, vector<32x128xf32>
    %c0_1 = arith.constant 0 : index
    %c0_2 = arith.constant 0 : index
    %1 = vector.load %arg2[%c0_1, %c0_2] : memref<32x128xf32, #tpu.memory_space<vmem>>, vector<32x128xf32>
    %c0_3 = arith.constant 0 : index
    %c0_4 = arith.constant 0 : index
    %2 = vector.load %arg3[%c0_3, %c0_4] : memref<32x128xf32, #tpu.memory_space<vmem>>, vector<32x128xf32>
    %c0_5 = arith.constant 0 : index
    %c0_6 = arith.constant 0 : index
    %3 = vector.load %arg4[%c0_5, %c0_6] : memref<32x1xf32, #tpu.memory_space<vmem>>, vector<32x1xf32>
    %4 = math.log %0 : vector<32x128xf32>
    %5 = vector.broadcast %3 : vector<32x1xf32> to vector<32x128xf32>
    %6 = arith.subf %4, %5 : vector<32x128xf32>
    %7 = math.log %1 : vector<32x128xf32>
    %8 = arith.mulf %1, %7 : vector<32x128xf32>
    %9 = math.log %2 : vector<32x128xf32>
    %10 = arith.mulf %2, %9 : vector<32x128xf32>
    %11 = arith.subf %8, %10 : vector<32x128xf32>
    %12 = arith.subf %1, %2 : vector<32x128xf32>
    %13 = arith.mulf %12, %6 : vector<32x128xf32>
    %14 = arith.addf %11, %13 : vector<32x128xf32>
    %cst = arith.constant dense<0.000000e+00> : vector<128xf32>
    %15 = vector.multi_reduction <add>, %14, %cst [0] : vector<32x128xf32> to vector<128xf32>
    %16 = vector.shape_cast %15 : vector<128xf32> to vector<1x128xf32>
    %cst_7 = arith.constant 1.000000e+01 : f32
    %17 = vector.broadcast %cst_7 : f32 to vector<1x128xf32>
    %18 = arith.mulf %17, %16 : vector<1x128xf32>
    %19 = arith.negf %18 : vector<1x128xf32>
    %20 = math.exp %19 : vector<1x128xf32>
    %cst_8 = arith.constant 1.000000e+00 : f32
    %21 = vector.broadcast %cst_8 : f32 to vector<1x128xf32>
    %22 = arith.addf %21, %20 : vector<1x128xf32>
    %23 = arith.divf %21, %22 : vector<1x128xf32>
    %c0_9 = arith.constant 0 : index
    %c0_10 = arith.constant 0 : index
    %24 = vector.load %arg5[%c0_9, %c0_10] : memref<1x128xf32, #tpu.memory_space<vmem>>, vector<1x128xf32>
    tpu.vector_store %arg5[%c0_9, %c0_10], %23 {strides = array<i32>} : memref<1x128xf32, #tpu.memory_space<vmem>>, vector<1x128xf32>,
    return
  }
  func.func @transform_0(%arg0: i32) -> (i32, i32) {
    %c0_i32 = arith.constant 0 : i32
    %c0_i32_0 = arith.constant 0 : i32
    return %c0_i32, %arg0 : i32, i32
  }
  func.func @transform_1(%arg0: i32) -> (i32, i32) {
    %c0_i32 = arith.constant 0 : i32
    %c0_i32_0 = arith.constant 0 : i32
    return %c0_i32, %arg0 : i32, i32
  }
  func.func @transform_2(%arg0: i32) -> (i32, i32) {
    %c0_i32 = arith.constant 0 : i32
    %c0_i32_0 = arith.constant 0 : i32
    return %c0_i32, %arg0 : i32, i32
  }
  func.func @transform_3(%arg0: i32) -> (i32, i32) {
    %c0_i32 = arith.constant 0 : i32
    %c0_i32_0 = arith.constant 0 : i32
    %c0_i32_1 = arith.constant 0 : i32
    return %c0_i32, %c0_i32_0 : i32, i32
  }
  func.func @transform_4(%arg0: i32) -> (i32, i32) {
    %c0_i32 = arith.constant 0 : i32
    %c0_i32_0 = arith.constant 0 : i32
    return %c0_i32, %arg0 : i32, i32
  }
}

</mosaic_0001>

<llo_original>
// kernel: tpu_custom_call.1
$region0: #{tpu_custom_call.1}
  #allocation0 [shape = 'u32[]', space=smem, size = 0x4, offset = 0x4, fixed_abs, tag = 'smem constant byte address 0x4 - core index']
  #allocation1 [shape = 'u32[72,128]{1,0:T(1,128)}', space=vmem, size = 0x9000, scoped, tag = 'internal scratch']
  %s0 = inlined_call_operand.vmem [shape: f32[32,128], index: 0, kind: input, shape index: {}]
  %s1 = inlined_call_operand.hbm [shape: f32[32,128], index: 1, kind: input, shape index: {}]
  %s2 = inlined_call_operand.hbm [shape: f32[32,128], index: 2, kind: input, shape index: {}]
  %s3 = inlined_call_operand.vmem [shape: f32[32,1], index: 3, kind: input, shape index: {}]
  %s4 = inlined_call_operand.hbm [shape: f32[1,128], index: 4, kind: output, shape index: {}]
  %s5 = sld [smem:[#allocation0]]
  $region34: #{tpu_custom_call.1} parent=0
    _
  %s7 = ssub.s32 1, %s5
  %s8 = scalar_select 0, %s7, %s5
  $region1: #{tpu_custom_call.1} parent=0
    #allocation2 [shape = 'u8[16384]{0}', space=vmem, size = 0x4000, scoped, tag = 'input window, operand 1, single buffered']
    #allocation3 [shape = 's32[1]{0}', space=sflag, size = 0x4, scoped, tag = 'scoped memory for tpu_custom_call.1']
    #allocation4 [shape = 's32[1]{0}', space=sflag, size = 0x4, scoped, tag = 'scoped memory for tpu_custom_call.1']
    #allocation5 [shape = 'u8[16384]{0}', space=vmem, size = 0x4000, scoped, tag = 'input window, operand 2, single buffered']
    #allocation6 [shape = 's32[1]{0}', space=sflag, size = 0x4, scoped, tag = 'scoped memory for tpu_custom_call.1']
    #allocation7 [shape = 'u8[512]{0}', space=vmem, size = 0x400, scoped, tag = 'output window, operand 0, single buffered']
    %9 = vsyncpa [#allocation3], 0
    %10 = vsyncpa [#allocation6], 0
    %11 = vsyncpa [#allocation4], 0
    // Predicated region
    $region2: #{tpu_custom_call.1} parent=1 // pred_check
      _
    $region3: #{tpu_custom_call.1} parent=1 // pred_check_branch
      %13 = sbr.rel (0) target = $region5
    $region4: #{tpu_custom_call.1} parent=1 // pred_region
      _
    $region5: #{tpu_custom_call.1} parent=1 // pred_fallthru
      _
    // Predicated region
    $region6: #{tpu_custom_call.1} parent=1 // pred_check
      _
    $region7: #{tpu_custom_call.1} parent=1 // pred_check_branch
      %15 = sbr.rel (0) target = $region9
    $region8: #{tpu_custom_call.1} parent=1 // pred_region
      %17 = vsyncadd [#allocation3], 0
      %s18 = sshll.u32 %s1, 4
      %s19 = int_to_ptr.hbm [resolvable:$true] %s18
      %s20 = sshll.u32 [#allocation2], 4
      %s21 = int_to_ptr.vmem [resolvable:$true] %s20
      %26 = dma.hbm_to_vmem [thread:$0]  %s19, 512, %s21, [#allocation3], 128, 128, 8
    $region9: #{tpu_custom_call.1} parent=1 // pred_fallthru
      _
    // Predicated region
    $region10: #{tpu_custom_call.1} parent=1 // pred_check
      _
    $region11: #{tpu_custom_call.1} parent=1 // pred_check_branch
      %28 = sbr.rel (0) target = $region13
    $region12: #{tpu_custom_call.1} parent=1 // pred_region
      %30 = vsyncadd [#allocation6], 0
      %s31 = sshll.u32 %s2, 4
      %s32 = int_to_ptr.hbm [resolvable:$true] %s31
      %s33 = sshll.u32 [#allocation5], 4
      %s34 = int_to_ptr.vmem [resolvable:$true] %s33
      %39 = dma.hbm_to_vmem [thread:$0]  %s32, 512, %s34, [#allocation6], 128, 128, 8
    $region13: #{tpu_custom_call.1} parent=1 // pred_fallthru
      _
    // Predicated region
    $region14: #{tpu_custom_call.1} parent=1 // pred_check
      _
    $region15: #{tpu_custom_call.1} parent=1 // pred_check_branch
      %41 = sbr.rel (0) target = $region17
    $region16: #{tpu_custom_call.1} parent=1 // pred_region
      _
    $region17: #{tpu_custom_call.1} parent=1 // pred_fallthru
      _
    // Predicated region
    $region18: #{tpu_custom_call.1} parent=1 // pred_check
      _
    $region19: #{tpu_custom_call.1} parent=1 // pred_check_branch
      %43 = sbr.rel (0) target = $region21
    $region20: #{tpu_custom_call.1} parent=1 // pred_region
      %45 = dma.done [#allocation3], 512
    $region21: #{tpu_custom_call.1} parent=1 // pred_fallthru
      _
    // Predicated region
    $region22: #{tpu_custom_call.1} parent=1 // pred_check
      _
    $region23: #{tpu_custom_call.1} parent=1 // pred_check_branch
      %47 = sbr.rel (0) target = $region25
    $region24: #{tpu_custom_call.1} parent=1 // pred_region
      %49 = dma.done [#allocation6], 512
    $region25: #{tpu_custom_call.1} parent=1 // pred_fallthru
      _
    %v50 = vld [vmem:[%s0] sm:$0xff]
    %v51 = vld [vmem:[%s0 + $0x8] sm:$0xff]
    %v52 = vld [vmem:[%s0 + $0x10] sm:$0xff]
    %v53 = vld [vmem:[%s0 + $0x18] sm:$0xff]
    %v54 = vld [vmem:[#allocation2] sm:$0xff]
    %v55 = vld [vmem:[#allocation2 + $0x8] sm:$0xff]
    %v56 = vld [vmem:[#allocation2 + $0x10] sm:$0xff]
    %v57 = vld [vmem:[#allocation2 + $0x18] sm:$0xff]
    %v58 = vld [vmem:[#allocation5] sm:$0xff]
    %v59 = vld [vmem:[#allocation5 + $0x8] sm:$0xff]
    %v60 = vld [vmem:[#allocation5 + $0x10] sm:$0xff]
    %v61 = vld [vmem:[#allocation5 + $0x18] sm:$0xff]
    %v62 = vld [vmem:[%s3] sm:$0xff]
    %v63 = vld [vmem:[%s3 + $0x8] sm:$0xff]
    %v64 = vld [vmem:[%s3 + $0x10] sm:$0xff]
    %v65 = vld [vmem:[%s3 + $0x18] sm:$0xff]
    %v66 = vlog2.pop %v50
    %v67 = vmul.f32 %v66, 0.6931472
    %v68 = vlog2.pop %v51
    %v69 = vmul.f32 %v68, 0.6931472
    %v70 = vlog2.pop %v52
    %v71 = vmul.f32 %v70, 0.6931472
    %v72 = vlog2.pop %v53
    %v73 = vmul.f32 %v72, 0.6931472
    %75 = vset.pattern.permute.xlu0 0
    %76 = vperm.xlu0 %75, %v62
    %v77 = vpop.permute.xlu0 %76
    %80 = vset.pattern.permute.xlu0 0
    %81 = vperm.xlu0 %80, %v63
    %v82 = vpop.permute.xlu0 %81
    %85 = vset.pattern.permute.xlu0 0
    %86 = vperm.xlu0 %85, %v64
    %v87 = vpop.permute.xlu0 %86
    %90 = vset.pattern.permute.xlu0 0
    %91 = vperm.xlu0 %90, %v65
    %v92 = vpop.permute.xlu0 %91
    %v94 = vsub.f32 %v67, %v77
    %v95 = vsub.f32 %v69, %v82
    %v96 = vsub.f32 %v71, %v87
    %v97 = vsub.f32 %v73, %v92
    %v98 = vlog2.pop %v54
    %v99 = vmul.f32 %v98, 0.6931472
    %v100 = vlog2.pop %v55
    %v101 = vmul.f32 %v100, 0.6931472
    %v102 = vlog2.pop %v56
    %v103 = vmul.f32 %v102, 0.6931472
    %v104 = vlog2.pop %v57
    %v105 = vmul.f32 %v104, 0.6931472
    %v106 = vmul.f32 %v54, %v99
    %v107 = vmul.f32 %v55, %v101
    %v108 = vmul.f32 %v56, %v103
    %v109 = vmul.f32 %v57, %v105
    %v110 = vlog2.pop %v58
    %v111 = vmul.f32 %v110, 0.6931472
    %v112 = vlog2.pop %v59
    %v113 = vmul.f32 %v112, 0.6931472
    %v114 = vlog2.pop %v60
    %v115 = vmul.f32 %v114, 0.6931472
    %v116 = vlog2.pop %v61
    %v117 = vmul.f32 %v116, 0.6931472
    %v118 = vmul.f32 %v58, %v111
    %v119 = vmul.f32 %v59, %v113
    %v120 = vmul.f32 %v60, %v115
    %v121 = vmul.f32 %v61, %v117
    %v122 = vsub.f32 %v106, %v118
    %v123 = vsub.f32 %v107, %v119
    %v124 = vsub.f32 %v108, %v120
    %v125 = vsub.f32 %v109, %v121
    %v126 = vsub.f32 %v54, %v58
    %v127 = vsub.f32 %v55, %v59
    %v128 = vsub.f32 %v56, %v60
    %v129 = vsub.f32 %v57, %v61
    %v130 = vmul.f32 %v126, %v94
    %v131 = vmul.f32 %v127, %v95
    %v132 = vmul.f32 %v128, %v96
    %v133 = vmul.f32 %v129, %v97
    %v134 = vadd.f32 %v122, %v130
    %v135 = vadd.f32 %v123, %v131
    %v136 = vadd.f32 %v124, %v132
    %v137 = vadd.f32 %v125, %v133
    %v138 = vadd.f32 %v134, %v135
    %v139 = vadd.f32 %v138, %v136
    %v140 = vadd.f32 %v139, %v137
    %v141 = vrot.slane %v140, 4
    %v142 = vadd.f32 %v140, %v141
    %v143 = vrot.slane %v142, 2
    %v144 = vadd.f32 %v142, %v143
    %v145 = vrot.slane %v144, 1
    %v146 = vadd.f32 %v144, %v145
    %v147 = vmul.f32 %v146, 10.0
    %v148 = vxor.u32 %v147, 2147483648
    %v149 = vmul.f32 %v148, 1.442695
    %v150 = vpow.pop %v149
    %v151 = vadd.f32 %v150, 1.0
    %v152 = vrcp.pop %v151
    %v153 = vmul.f32 %v151, %v152
    %v154 = vsub.f32 1.0, %v153
    %v155 = vmul.f32 %v152, %v154
    %v156 = vadd.f32 %v152, %v155
    %vm157 = vweird.f32 %v151
    %vm158 = vweird.f32 %v152
    %vm159 = vmor %vm157, %vm158
    %v160 = vsel %vm159, %v152, %v156
    %v161 = vand.u32 2147483647, %v151
    %vm162 = vcmp.eq.f32.partialorder %v161, 8.507059e+37
    %v163 = vand.u32 %v151, 2147483648
    %v164 = vor.u32 1.1754944e-38, %v163
    %v165 = vsel %vm162, %v164, %v160
    %v166 = vmul.f32 1.0, %v165
    %167 = vst [vmem:[#allocation7] sm:$0x1] %v166
    // Predicated region
    $region26: #{tpu_custom_call.1} parent=1 // pred_check
      _
    $region27: #{tpu_custom_call.1} parent=1 // pred_check_branch
      %169 = sbr.rel (0) target = $region29
    $region28: #{tpu_custom_call.1} parent=1 // pred_region
      %171 = vsyncadd [#allocation4], 0
      %s173 = sshll.u32 [#allocation7], 4
      %s174 = int_to_ptr.vmem [resolvable:$true] %s173
      %s175 = sshll.u32 %s4, 4
      %s176 = int_to_ptr.hbm [resolvable:$true] %s175
      %178 = dma.vmem_to_hbm [thread:$0]  %s174, 16, %s176, [#allocation4]
    $region29: #{tpu_custom_call.1} parent=1 // pred_fallthru
      _
    // Predicated region
    $region30: #{tpu_custom_call.1} parent=1 // pred_check
      _
    $region31: #{tpu_custom_call.1} parent=1 // pred_check_branch
      %180 = sbr.rel (0) target = $region33
    $region32: #{tpu_custom_call.1} parent=1 // pred_region
      %182 = dma.done [#allocation4], 16
    $region33: #{tpu_custom_call.1} parent=1 // pred_fallthru
      _
    %183 = vsyncpa [#allocation3], 1
    %184 = vsyncpa [#allocation6], 1
    %185 = vsyncpa [#allocation4], 1

</llo_original>
